<compile_context>
chip_gen: v7x
topology: tpu7x:2x2x1
jax: 0.10.0
libtpu: 0.0.40
codegen_flags: <defaults>
</compile_context>

<pallas_src>
import functools

import jax
import jax.numpy as jnp
from jax.experimental import pallas as pl
from jax.experimental.pallas import tpu as pltpu


# ------------------------------- helpers -------------------------------------

def _round_up(a, b):
    return ((a + b - 1) // b) * b


def _cdiv(a, b):
    return (a + b - 1) // b


def _vmem_cap_bytes():
    """~60% of this generation's physical VMEM (64 MiB v7x, 128 MiB v5e/v6e)."""
    try:
        info = pltpu.get_tpu_info()
        phys = int(getattr(info, "vmem_capacity_bytes", 64 << 20))
    except Exception:
        phys = 64 << 20
    return int(phys * 0.6)


# ------------------------- fast path: weights resident ------------------------

def ffn_resident_kernel(x_ref, w1_ref, b1_ref, w2_ref, b2_ref, o_ref):
    """out = relu(x @ w1 + b1) @ w2 + b2 with full w1/w2 resident in VMEM.

    x/w1/w2 are bf16 (pre-cast in the wrapper); bias adds, ReLU and the MXU
    accumulation are f32. The (tm, d_ff) hidden activation never touches HBM.
    dropout (eval mode) is the identity.
    """
    h = jnp.dot(x_ref[...], w1_ref[...],
                preferred_element_type=jnp.float32) + b1_ref[...]
    h = jnp.maximum(h, 0.0)
    out = jnp.dot(h.astype(w2_ref.dtype), w2_ref[...],
                  preferred_element_type=jnp.float32) + b2_ref[...]
    o_ref[...] = out.astype(o_ref.dtype)


# --------------------- reduction path: d_ff split on the grid -----------------

def ffn_reduce_kernel(x_ref, w1_ref, b1_ref, w2_ref, b2_ref, o_ref, *scratch):
    """Same math with d_ff tiled on grid axis 1 (reduction, "arbitrary").

    If the output is f32, o_ref itself is the accumulator (it is resident
    across the j axis); otherwise a f32 VMEM scratch accumulator is used.
    """
    acc_ref = scratch[0] if scratch else o_ref
    j = pl.program_id(1)

    @pl.when(j == 0)
    def _init():
        acc_ref[...] = jnp.zeros_like(acc_ref)

    h = jnp.dot(x_ref[...], w1_ref[...],
                preferred_element_type=jnp.float32) + b1_ref[...]
    h = jnp.maximum(h, 0.0)  # relu; dropout(eval) == identity
    acc_ref[...] += jnp.dot(h.astype(w2_ref.dtype), w2_ref[...],
                            preferred_element_type=jnp.float32)

    @pl.when(j == pl.num_programs(1) - 1)
    def _finalize():
        o_ref[...] = (acc_ref[...] + b2_ref[...]).astype(o_ref.dtype)


# ------------------------------- wrapper --------------------------------------

def feed_forward_block(x, w1, b1, w2, b2, *,
                       tile_m=512, tile_ff=512,
                       compute_dtype=jnp.bfloat16,
                       _force_reduce=False):
    """FeedForwardBlock forward: x -> linear1 -> relu -> (dropout=id) -> linear2.

    x: (..., d_model); w1: (d_model, d_ff); b1: (1, d_ff) or (d_ff,);
    w2: (d_ff, d_model); b2: (1, d_model) or (d_model,).
    """
    orig_shape = x.shape
    out_dtype = x.dtype
    D = orig_shape[-1]
    d_ff = w1.shape[1]

    x2d = x.reshape(-1, D)
    M = x2d.shape[0]

    # Pre-cast streamed matmul operands to bf16 once, in the wrapper.
    x2d = x2d.astype(compute_dtype)
    w1c = w1.astype(compute_dtype)
    w2c = w2.astype(compute_dtype)
    b1c = b1.reshape(1, d_ff).astype(jnp.float32)
    b2c = b2.reshape(1, D).astype(jnp.float32)

    cdt_b = jnp.dtype(compute_dtype).itemsize
    out_b = jnp.dtype(out_dtype).itemsize
    vmem_cap = _vmem_cap_bytes()

    # ---- token-dim tile ------------------------------------------------------
    tm = min(tile_m, _round_up(M, 8))
    # Megacore (v7x has 2 TCs): ensure the "parallel" axis has >= 2 blocks.
    if _cdiv(M, tm) == 1 and M > 8:
        tm = _round_up(_cdiv(M, 2), 8)

    # ---- fast path: both weight matrices (bf16) resident in VMEM -------------
    def _resident_bytes(tm_):
        return (2 * tm_ * D * cdt_b            # x, double-buffered
                + 2 * D * d_ff * cdt_b         # w1 (x2 for safety)
                + 2 * d_ff * D * cdt_b         # w2
                + 2 * tm_ * D * out_b          # out, double-buffered
                + 8 * (d_ff + D) * 4           # biases (sublane-padded)
                + tm_ * d_ff * 4               # f32 hidden activation
                + (2 << 20))                   # compiler scratch slack

    while _resident_bytes(tm) > vmem_cap and tm > 256:
        tm = max(256, tm // 2)

    if (not _force_reduce) and _resident_bytes(tm) <= vmem_cap:
        m_pad = _round_up(M, tm)
        m_tiles = m_pad // tm
        if m_pad != M:
            x2d = jnp.pad(x2d, ((0, m_pad - M), (0, 0)))

        cost = pl.CostEstimate(
            flops=4 * m_pad * D * d_ff,
            transcendentals=0,
            bytes_accessed=(m_pad * D * (cdt_b + out_b)     # x in + out
                            + 2 * D * d_ff * cdt_b          # weights, read once
                            + (d_ff + D) * 4),              # biases
        )
        vmem_bytes = int(min(max(_resident_bytes(tm), 4 << 20), vmem_cap))

        out2d = pl.pallas_call(
            ffn_resident_kernel,
            out_shape=jax.ShapeDtypeStruct((m_pad, D), out_dtype),
            grid_spec=pltpu.PrefetchScalarGridSpec(
                num_scalar_prefetch=0,
                grid=(m_tiles,),
                in_specs=[
                    pl.BlockSpec((tm, D), lambda i: (i, 0)),     # x tile
                    pl.BlockSpec((D, d_ff), lambda i: (0, 0)),   # w1 resident
                    pl.BlockSpec((1, d_ff), lambda i: (0, 0)),   # b1 resident
                    pl.BlockSpec((d_ff, D), lambda i: (0, 0)),   # w2 resident
                    pl.BlockSpec((1, D), lambda i: (0, 0)),      # b2 resident
                ],
                out_specs=pl.BlockSpec((tm, D), lambda i: (i, 0)),
            ),
            compiler_params=pltpu.CompilerParams(
                dimension_semantics=("parallel",),
                vmem_limit_bytes=vmem_bytes,
            ),
            cost_estimate=cost,
        )(x2d, w1c, b1c, w2c, b2c)
        return out2d[:M].reshape(orig_shape)

    # ---- reduction path: d_ff tiled on grid axis 1 ---------------------------
    # Keep tff a multiple of 256 so both matmuls feed the 256-wide MXU
    # (v6e/v7x); v5e (128-wide) is also satisfied.
    tff = min(tile_ff, _round_up(d_ff, 256))

    def _blk_bytes(tm_, tff_):
        return (2 * tm_ * D * cdt_b            # x (resident over j, 2x safe)
                + 2 * D * tff_ * cdt_b         # w1 tile
                + 2 * tff_ * D * cdt_b         # w2 tile
                + 2 * tm_ * D * out_b          # out
                + 8 * (tff_ + D) * 4           # biases
                + tm_ * tff_ * 4               # f32 hidden tile
                + tm_ * D * 4                  # f32 accumulator
                + (2 << 20))                   # slack

    while _blk_bytes(tm, tff) > vmem_cap and tff > 256:
        tff = max(256, tff // 2)
    while _blk_bytes(tm, tff) > vmem_cap and tm > 256:
        tm = max(256, tm // 2)

    m_pad = _round_up(M, tm)
    m_tiles = m_pad // tm
    ff_pad = _round_up(d_ff, tff)
    ff_tiles = ff_pad // tff

    if m_pad != M:
        x2d = jnp.pad(x2d, ((0, m_pad - M), (0, 0)))
    if ff_pad != d_ff:
        # Zero-padding d_ff is exact: relu(0 + 0) = 0 contributes nothing.
        w1c = jnp.pad(w1c, ((0, 0), (0, ff_pad - d_ff)))
        b1c = jnp.pad(b1c, ((0, 0), (0, ff_pad - d_ff)))
        w2c = jnp.pad(w2c, ((0, ff_pad - d_ff), (0, 0)))

    acc_in_output = (jnp.dtype(out_dtype) == jnp.dtype(jnp.float32))
    scratch_shapes = () if acc_in_output else (pltpu.VMEM((tm, D), jnp.float32),)

    cost = pl.CostEstimate(
        flops=4 * m_pad * D * ff_pad,
        transcendentals=0,
        bytes_accessed=(m_pad * D * (cdt_b + out_b)               # x in + out
                        + m_tiles * 2 * D * ff_pad * cdt_b        # weights per m-tile
                        + (ff_pad + D) * 4),                      # biases
    )
    vmem_bytes = int(min(max(_blk_bytes(tm, tff), 4 << 20), vmem_cap))

    out2d = pl.pallas_call(
        ffn_reduce_kernel,
        out_shape=jax.ShapeDtypeStruct((m_pad, D), out_dtype),
        grid_spec=pltpu.PrefetchScalarGridSpec(
            num_scalar_prefetch=0,
            grid=(m_tiles, ff_tiles),
            in_specs=[
                pl.BlockSpec((tm, D), lambda i, j: (i, 0)),    # x (resident over j)
                pl.BlockSpec((D, tff), lambda i, j: (0, j)),   # w1 tile
                pl.BlockSpec((1, tff), lambda i, j: (0, j)),   # b1 tile
                pl.BlockSpec((tff, D), lambda i, j: (j, 0)),   # w2 tile
                pl.BlockSpec((1, D), lambda i, j: (0, 0)),     # b2
            ],
            out_specs=pl.BlockSpec((tm, D), lambda i, j: (i, 0)),
            scratch_shapes=scratch_shapes,
        ),
        compiler_params=pltpu.CompilerParams(
            dimension_semantics=("parallel", "arbitrary"),
            vmem_limit_bytes=vmem_bytes,
        ),
        cost_estimate=cost,
    )(x2d, w1c, b1c, w2c, b2c)

    return out2d[:M].reshape(orig_shape)


# ------------------------------ reference ------------------------------------

def feed_forward_reference(x, w1, b1, w2, b2, compute_dtype=jnp.bfloat16):
    """Pure-JAX reference (same dot-boundary casts as the kernel)."""
    x2d = x.reshape(-1, x.shape[-1])
    h = jnp.dot(x2d.astype(compute_dtype), w1.astype(compute_dtype),
                preferred_element_type=jnp.float32) + b1.reshape(1, -1)
    h = jnp.maximum(h, 0.0)
    o = jnp.dot(h.astype(compute_dtype), w2.astype(compute_dtype),
                preferred_element_type=jnp.float32) + b2.reshape(1, -1)
    return o.reshape(x.shape).astype(x.dtype)


# --------------------------------- main ---------------------------------------

if __name__ == "__main__":
    # Small but lane-dense shapes (last dims multiples of 128).
    B, S = 2, 8
    d_model, d_ff = 128, 512

    key = jax.random.PRNGKey(0)
    kx, k1, k2, k3, k4 = jax.random.split(key, 5)

    x = jax.random.normal(kx, (B, S, d_model), jnp.float32)
    w1 = jax.random.normal(k1, (d_model, d_ff), jnp.float32) * 0.02
    b1 = jax.random.normal(k2, (1, d_ff), jnp.float32) * 0.02
    w2 = jax.random.normal(k3, (d_ff, d_model), jnp.float32) * 0.02
    b2 = jax.random.normal(k4, (1, d_model), jnp.float32) * 0.02

    ref = feed_forward_reference(x, w1, b1, w2, b2)

    # Fast path: weights resident in VMEM, 1-D grid over token tiles.
    fwd = jax.jit(feed_forward_block)
    out = fwd(x, w1, b1, w2, b2)
    jax.block_until_ready(out)
    assert out.shape == (B, S, d_model) and out.dtype == jnp.float32
    assert bool(jnp.all(jnp.isfinite(out)))
    assert bool(jnp.allclose(out, ref, atol=1e-2, rtol=1e-2)), (
        float(jnp.max(jnp.abs(out - ref))))

    # Reduction path (d_ff split across the grid) — exercised for coverage.
    fwd_red = jax.jit(functools.partial(feed_forward_block,
                                        tile_ff=256, _force_reduce=True))
    out_red = fwd_red(x, w1, b1, w2, b2)
    jax.block_until_ready(out_red)
    assert bool(jnp.allclose(out_red, ref, atol=1e-2, rtol=1e-2)), (
        float(jnp.max(jnp.abs(out_red - ref))))

    print("KERNEL_OK")
</pallas_src>

<mosaic_0001>
module attributes {stable_mosaic.version = 11 : i64} {
  func.func @ffn_resident_kernel(%arg0: i32, %arg1: memref<8x128xbf16, #tpu.memory_space<vmem>>, %arg2: memref<128x512xbf16, #tpu.memory_space<vmem>>, %arg3: memref<1x512xf32, #tpu.memory_space<vmem>>, %arg4: memref<512x128xbf16, #tpu.memory_space<vmem>>, %arg5: memref<1x128xf32, #tpu.memory_space<vmem>>, %arg6: memref<8x128xf32, #tpu.memory_space<vmem>>) attributes {dimension_semantics = [#tpu.dimension_semantics<parallel>], iteration_bounds = array<i64: 2>, scalar_prefetch = 0 : i64, scratch_operands = 0 : i64, tpu.core_type = #tpu.core_type<tc>, window_params = [{transform_indices = @transform_0, window_bounds = array<i64: 8, 128>}, {pipeline_mode = #tpu.pipeline_mode<synchronous>, transform_indices = @transform_1, window_bounds = array<i64: 128, 512>}, {pipeline_mode = #tpu.pipeline_mode<synchronous>, transform_indices = @transform_2, window_bounds = array<i64: 1, 512>}, {pipeline_mode = #tpu.pipeline_mode<synchronous>, transform_indices = @transform_3, window_bounds = array<i64: 512, 128>}, {pipeline_mode = #tpu.pipeline_mode<synchronous>, transform_indices = @transform_4, window_bounds = array<i64: 1, 128>}, {transform_indices = @transform_5, window_bounds = array<i64: 8, 128>}]} {
    %c0 = arith.constant 0 : index
    %c0_0 = arith.constant 0 : index
    %0 = vector.load %arg1[%c0, %c0_0] : memref<8x128xbf16, #tpu.memory_space<vmem>>, vector<8x128xbf16>
    %c0_1 = arith.constant 0 : index
    %c0_2 = arith.constant 0 : index
    %1 = vector.load %arg2[%c0_1, %c0_2] : memref<128x512xbf16, #tpu.memory_space<vmem>>, vector<128x512xbf16>
    %cst = arith.constant dense<0.000000e+00> : vector<8x512xf32>
    %2 = tpu.matmul %0, %1, %cst {dimension_numbers = #tpu.dot_dimension_numbers<[1], [0], [0], [1], [0, 0, 1, 1], [], []>} : vector<8x128xbf16>, vector<128x512xbf16>, vector<8x512xf32> -> vector<8x512xf32>
    %c0_3 = arith.constant 0 : index
    %c0_4 = arith.constant 0 : index
    %3 = vector.load %arg3[%c0_3, %c0_4] : memref<1x512xf32, #tpu.memory_space<vmem>>, vector<1x512xf32>
    %4 = vector.broadcast %3 : vector<1x512xf32> to vector<8x512xf32>
    %5 = arith.addf %2, %4 : vector<8x512xf32>
    %cst_5 = arith.constant 0.000000e+00 : f32
    %6 = vector.broadcast %cst_5 : f32 to vector<8x512xf32>
    %7 = arith.maximumf %5, %6 : vector<8x512xf32>
    %8 = arith.truncf %7 : vector<8x512xf32> to vector<8x512xbf16>
    %c0_6 = arith.constant 0 : index
    %c0_7 = arith.constant 0 : index
    %9 = vector.load %arg4[%c0_6, %c0_7] : memref<512x128xbf16, #tpu.memory_space<vmem>>, vector<512x128xbf16>
    %cst_8 = arith.constant dense<0.000000e+00> : vector<8x128xf32>
    %10 = tpu.matmul %8, %9, %cst_8 {dimension_numbers = #tpu.dot_dimension_numbers<[1], [0], [0], [1], [0, 0, 1, 1], [], []>} : vector<8x512xbf16>, vector<512x128xbf16>, vector<8x128xf32> -> vector<8x128xf32>
    %c0_9 = arith.constant 0 : index
    %c0_10 = arith.constant 0 : index
    %11 = vector.load %arg5[%c0_9, %c0_10] : memref<1x128xf32, #tpu.memory_space<vmem>>, vector<1x128xf32>
    %12 = vector.broadcast %11 : vector<1x128xf32> to vector<8x128xf32>
    %13 = arith.addf %10, %12 : vector<8x128xf32>
    %c0_11 = arith.constant 0 : index
    %c0_12 = arith.constant 0 : index
    %14 = vector.load %arg6[%c0_11, %c0_12] : memref<8x128xf32, #tpu.memory_space<vmem>>, vector<8x128xf32>
    tpu.vector_store %arg6[%c0_11, %c0_12], %13 {strides = array<i32>} : memref<8x128xf32, #tpu.memory_space<vmem>>, vector<8x128xf32>,
    return
  }
  func.func @transform_0(%arg0: i32) -> (i32, i32) {
    %c0_i32 = arith.constant 0 : i32
    %c0_i32_0 = arith.constant 0 : i32
    return %arg0, %c0_i32 : i32, i32
  }
  func.func @transform_1(%arg0: i32) -> (i32, i32) {
    %c0_i32 = arith.constant 0 : i32
    %c0_i32_0 = arith.constant 0 : i32
    %c0_i32_1 = arith.constant 0 : i32
    return %c0_i32, %c0_i32_0 : i32, i32
  }
  func.func @transform_2(%arg0: i32) -> (i32, i32) {
    %c0_i32 = arith.constant 0 : i32
    %c0_i32_0 = arith.constant 0 : i32
    %c0_i32_1 = arith.constant 0 : i32
    return %c0_i32, %c0_i32_0 : i32, i32
  }
  func.func @transform_3(%arg0: i32) -> (i32, i32) {
    %c0_i32 = arith.constant 0 : i32
    %c0_i32_0 = arith.constant 0 : i32
    %c0_i32_1 = arith.constant 0 : i32
    return %c0_i32, %c0_i32_0 : i32, i32
  }
  func.func @transform_4(%arg0: i32) -> (i32, i32) {
    %c0_i32 = arith.constant 0 : i32
    %c0_i32_0 = arith.constant 0 : i32
    %c0_i32_1 = arith.constant 0 : i32
    return %c0_i32, %c0_i32_0 : i32, i32
  }
  func.func @transform_5(%arg0: i32) -> (i32, i32) {
    %c0_i32 = arith.constant 0 : i32
    %c0_i32_0 = arith.constant 0 : i32
    return %arg0, %c0_i32 : i32, i32
  }
}

</mosaic_0001>

<llo_original>
// kernel: feed_forward_block.1
$region0: #{feed_forward_block.1}
  #allocation0 [shape = 'u32[]', space=smem, size = 0x4, offset = 0x4, fixed_abs, tag = 'smem constant byte address 0x4 - core index']
  #allocation1 [shape = 'u32[144,128]{1,0:T(1,128)}', space=vmem, size = 0x12000, scoped, tag = 'internal scratch']
  %s0 = inlined_call_operand.vmem [shape: bf16[16,128], index: 0, kind: input, shape index: {}]
  %s1 = inlined_call_operand.vmem [shape: bf16[128,512], index: 1, kind: input, shape index: {}]
  %s2 = inlined_call_operand.vmem [shape: f32[1,512], index: 2, kind: input, shape index: {}]
  %s3 = inlined_call_operand.vmem [shape: bf16[512,128], index: 3, kind: input, shape index: {}]
  %s4 = inlined_call_operand.vmem [shape: f32[1,128], index: 4, kind: input, shape index: {}]
  %s5 = inlined_call_operand.hbm [shape: f32[16,128], index: 5, kind: output, shape index: {}]
  %s6 = sld [smem:[#allocation0]]
  $region53: #{feed_forward_block.1} parent=0
    _
  %s8 = ssub.s32 1, %s6
  %s9 = scalar_select 0, %s8, %s6
  $region1: #{feed_forward_block.1} parent=0
    #allocation2 [shape = 'u8[8192]{0}', space=vmem, size = 0x2000, scoped, tag = 'output window, operand 0']
    #allocation3 [shape = 's32[2]{0}', space=sflag, size = 0x8, scoped, tag = 'scoped memory for feed_forward_block.1']
    %10 = vsyncpa [#allocation3], 0
    %s11 = scalar_lea.sflag [#allocation3], 1
    %12 = vsyncpa %s11, 0
    loop: start=0, step=1, limit=4
    $region2: #{feed_forward_block.1} parent=1 // loop_pre_header
      _
    $region3: #{feed_forward_block.1} parent=1 // loop_header
      %s14 = sphi 0, %s18
      %p15 = scmp.ge.s32.totalorder %s14, 4
      %s24 = sphi 0, %s26
      %s27 = sphi 0, %s24
      %s28 = sphi 0, %s27
      %s44 = sphi 0, %s28
      %s48 = sphi 0, %s48
      %s50 = sphi 0, %s48
      %s51 = sphi 0, %s50
      %s65 = sphi 0, %s51
      %s69 = sphi 0, %s69
      %s71 = sphi 0, %s69
      %s72 = sphi 0, %s71
      %s86 = sphi 0, %s72
      %s90 = sphi 0, %s90
      %s92 = sphi 0, %s90
      %s93 = sphi 0, %s92
      %s107 = sphi 0, %s93
      %s111 = sphi 0, %s111
      %s113 = sphi 0, %s111
      %s114 = sphi 0, %s113
      %s128 = sphi 0, %s114
      %s134 = sphi 0, %s136
      %s137 = sphi 0, %s134
      %s138 = sphi 0, %s137
      %s154 = sphi 0, %s138
    $region4: #{feed_forward_block.1} parent=1 // loop_header_branch
      %17 = sbr.rel (%p15) target = $region8
    $region5: #{feed_forward_block.1} parent=1 // loop_body
      %s19 = ssub.s32 %s14, 1
      %s20 = ssub.s32 %s14, 2
      %s21 = sadd.s32 %s14, 1
      %s22 = ssub.s32 %s14, %s21
      %p23 = scmp.eq.s32.totalorder %s22, 0
      %s25 = sadd.s32 %s24, 1
      %s26 = scalar_select %p23, %s24, %s25
      %p29 = pneg %p23
      %p30 = scmp.eq.s32.totalorder %s14, 1
      %p31 = por %p29, %p30
      %p32 = scmp.ne.s32.totalorder %s24, %s27
      %p33 = scmp.eq.s32.totalorder %s14, 0
      %p34 = por %p32, %p33
      %p35 = scmp.ne.s32.totalorder %s24, %s27
      %p36 = scmp.eq.s32.totalorder %s19, 1
      %p37 = por %p35, %p36
      %p38 = scmp.ne.s32.totalorder %s27, %s28
      %p39 = scmp.eq.s32.totalorder %s19, 0
      %p40 = por %p38, %p39
      %p41 = scmp.ne.s32.totalorder %s27, %s28
      %p42 = scmp.eq.s32.totalorder %s20, 1
      %p43 = por %p41, %p42
      %p45 = scmp.ne.s32.totalorder %s28, %s44
      %p46 = scmp.eq.s32.totalorder %s20, 0
      %p47 = por %p45, %p46
      %s49 = sadd.s32 %s48, 1
      %p52 = scmp.eq.s32.totalorder %s14, 1
      %p53 = scmp.ne.s32.totalorder %s48, %s50
      %p54 = scmp.eq.s32.totalorder %s14, 0
      %p55 = por %p53, %p54
      %p56 = scmp.ne.s32.totalorder %s48, %s50
      %p57 = scmp.eq.s32.totalorder %s19, 1
      %p58 = por %p56, %p57
      %p59 = scmp.ne.s32.totalorder %s50, %s51
      %p60 = scmp.eq.s32.totalorder %s19, 0
      %p61 = por %p59, %p60
      %p62 = scmp.ne.s32.totalorder %s50, %s51
      %p63 = scmp.eq.s32.totalorder %s20, 1
      %p64 = por %p62, %p63
      %p66 = scmp.ne.s32.totalorder %s51, %s65
      %p67 = scmp.eq.s32.totalorder %s20, 0
      %p68 = por %p66, %p67
      %s70 = sadd.s32 %s69, 1
      %p73 = scmp.eq.s32.totalorder %s14, 1
      %p74 = scmp.ne.s32.totalorder %s69, %s71
      %p75 = scmp.eq.s32.totalorder %s14, 0
      %p76 = por %p74, %p75
      %p77 = scmp.ne.s32.totalorder %s69, %s71
      %p78 = scmp.eq.s32.totalorder %s19, 1
      %p79 = por %p77, %p78
      %p80 = scmp.ne.s32.totalorder %s71, %s72
      %p81 = scmp.eq.s32.totalorder %s19, 0
      %p82 = por %p80, %p81
      %p83 = scmp.ne.s32.totalorder %s71, %s72
      %p84 = scmp.eq.s32.totalorder %s20, 1
      %p85 = por %p83, %p84
      %p87 = scmp.ne.s32.totalorder %s72, %s86
      %p88 = scmp.eq.s32.totalorder %s20, 0
      %p89 = por %p87, %p88
      %s91 = sadd.s32 %s90, 1
      %p94 = scmp.eq.s32.totalorder %s14, 1
      %p95 = scmp.ne.s32.totalorder %s90, %s92
      %p96 = scmp.eq.s32.totalorder %s14, 0
      %p97 = por %p95, %p96
      %p98 = scmp.ne.s32.totalorder %s90, %s92
      %p99 = scmp.eq.s32.totalorder %s19, 1
      %p100 = por %p98, %p99
      %p101 = scmp.ne.s32.totalorder %s92, %s93
      %p102 = scmp.eq.s32.totalorder %s19, 0
      %p103 = por %p101, %p102
      %p104 = scmp.ne.s32.totalorder %s92, %s93
      %p105 = scmp.eq.s32.totalorder %s20, 1
      %p106 = por %p104, %p105
      %p108 = scmp.ne.s32.totalorder %s93, %s107
      %p109 = scmp.eq.s32.totalorder %s20, 0
      %p110 = por %p108, %p109
      %s112 = sadd.s32 %s111, 1
      %p115 = scmp.eq.s32.totalorder %s14, 1
      %p116 = scmp.ne.s32.totalorder %s111, %s113
      %p117 = scmp.eq.s32.totalorder %s14, 0
      %p118 = por %p116, %p117
      %p119 = scmp.ne.s32.totalorder %s111, %s113
      %p120 = scmp.eq.s32.totalorder %s19, 1
      %p121 = por %p119, %p120
      %p122 = scmp.ne.s32.totalorder %s113, %s114
      %p123 = scmp.eq.s32.totalorder %s19, 0
      %p124 = por %p122, %p123
      %p125 = scmp.ne.s32.totalorder %s113, %s114
      %p126 = scmp.eq.s32.totalorder %s20, 1
      %p127 = por %p125, %p126
      %p129 = scmp.ne.s32.totalorder %s114, %s128
      %p130 = scmp.eq.s32.totalorder %s20, 0
      %p131 = por %p129, %p130
      %s132 = ssub.s32 %s14, %s21
      %p133 = scmp.eq.s32.totalorder %s132, 0
      %s135 = sadd.s32 %s134, 1
      %s136 = scalar_select %p133, %s134, %s135
      %p139 = pneg %p133
      %p140 = scmp.eq.s32.totalorder %s14, 1
      %p141 = por %p139, %p140
      %p142 = scmp.ne.s32.totalorder %s134, %s137
      %p143 = scmp.eq.s32.totalorder %s14, 0
      %p144 = por %p142, %p143
      %p145 = scmp.ne.s32.totalorder %s134, %s137
      %p146 = scmp.eq.s32.totalorder %s19, 1
      %p147 = por %p145, %p146
      %p148 = scmp.ne.s32.totalorder %s137, %s138
      %p149 = scmp.eq.s32.totalorder %s19, 0
      %p150 = por %p148, %p149
      %p151 = scmp.ne.s32.totalorder %s137, %s138
      %p152 = scmp.eq.s32.totalorder %s20, 1
      %p153 = por %p151, %p152
      %p155 = scmp.ne.s32.totalorder %s138, %s154
      %p156 = scmp.eq.s32.totalorder %s20, 0
      %p157 = por %p155, %p156
      %p158 = scmp.le.s32.totalorder 1, %s14
      %p159 = scmp.lt.s32.totalorder %s14, 3
      %p160 = pnand %p158, %p159
      %p161 = pneg %p160
      // Predicated region
      $region9: #{feed_forward_block.1} parent=5 // pred_check
        _
      $region10: #{feed_forward_block.1} parent=5 // pred_check_branch
        %163 = sbr.rel (%p160) target = $region12
      $region11: #{feed_forward_block.1} parent=5 // pred_region
        %s164 = ssub.s32 %s14, 1
        // Predicated region
        $region13: #{feed_forward_block.1} parent=11 // pred_check
          %p165 = pneg %p61
        $region14: #{feed_forward_block.1} parent=11 // pred_check_branch
          %167 = sbr.rel (%p165) target = $region16
        $region15: #{feed_forward_block.1} parent=11 // pred_region
          _
        $region16: #{feed_forward_block.1} parent=11 // pred_fallthru
          _
        // Predicated region
        $region17: #{feed_forward_block.1} parent=11 // pred_check
          %p168 = pneg %p82
        $region18: #{feed_forward_block.1} parent=11 // pred_check_branch
          %170 = sbr.rel (%p168) target = $region20
        $region19: #{feed_forward_block.1} parent=11 // pred_region
          _
        $region20: #{feed_forward_block.1} parent=11 // pred_fallthru
          _
        // Predicated region
        $region21: #{feed_forward_block.1} parent=11 // pred_check
          %p171 = pneg %p103
        $region22: #{feed_forward_block.1} parent=11 // pred_check_branch
          %173 = sbr.rel (%p171) target = $region24
        $region23: #{feed_forward_block.1} parent=11 // pred_region
          _
        $region24: #{feed_forward_block.1} parent=11 // pred_fallthru
          _
        // Predicated region
        $region25: #{feed_forward_block.1} parent=11 // pred_check
          %p174 = pneg %p124
        $region26: #{feed_forward_block.1} parent=11 // pred_check_branch
          %176 = sbr.rel (%p174) target = $region28
        $region27: #{feed_forward_block.1} parent=11 // pred_region
          _
        $region28: #{feed_forward_block.1} parent=11 // pred_fallthru
          _
      $region12: #{feed_forward_block.1} parent=5 // pred_fallthru
        _
      %p177 = scmp.lt.s32.totalorder %s14, 2
      // Predicated region
      $region29: #{feed_forward_block.1} parent=5 // pred_check
        %p178 = pneg %p177
      $region30: #{feed_forward_block.1} parent=5 // pred_check_branch
        %180 = sbr.rel (%p178) target = $region32
      $region31: #{feed_forward_block.1} parent=5 // pred_region
        // Predicated region
        $region33: #{feed_forward_block.1} parent=31 // pred_check
          %p181 = pneg %p34
        $region34: #{feed_forward_block.1} parent=31 // pred_check_branch
          %183 = sbr.rel (%p181) target = $region36
        $region35: #{feed_forward_block.1} parent=31 // pred_region
          %p184 = scmp.lt.s32.totalorder %s14, 1
          %s185 = scalar_select %p184, %s14, 1
          %s186 = smul.addr %s185, 4
          %s187 = scalar_lea.vmem %s0, %s186
        $region36: #{feed_forward_block.1} parent=31 // pred_fallthru
          _
      $region32: #{feed_forward_block.1} parent=5 // pred_fallthru
        _
      %p188 = scmp.le.s32.totalorder 1, %s14
      %p189 = scmp.lt.s32.totalorder %s14, 3
      %p190 = pnand %p188, %p189
      %p191 = pneg %p190
      // Predicated region
      $region37: #{feed_forward_block.1} parent=5 // pred_check
        _
      $region38: #{feed_forward_block.1} parent=5 // pred_check_branch
        %193 = sbr.rel (%p190) target = $region40
      $region39: #{feed_forward_block.1} parent=5 // pred_region
        %s194 = ssub.s32 %s14, 1
        %p195 = scmp.lt.s32.totalorder %s19, 1
        %s196 = scalar_select %p195, %s19, 1
        %s197 = smul.addr %s196, 4
        %s198 = scalar_lea.vmem %s0, %s197
        %p199 = pneg %p40
        %p200 = pneg %p37
        %p201 = pneg %p61
        %p202 = pneg %p58
        %p203 = pneg %p82
        %p204 = pneg %p79
        %p205 = pneg %p103
        %p206 = pneg %p100
        %p207 = pneg %p124
        %p208 = pneg %p121
        %p209 = pneg %p150
        %p210 = pneg %p147
        %s211 = sand.u32 %s137, 1
        %s212 = scalar_lea.sflag [#allocation3], %s211
        %s213 = sand.u32 %s137, 1
        %s214 = smul.addr %s213, 8
        %s215 = scalar_lea.vmem [#allocation2], %s214
        %p216 = scmp.lt.s32.totalorder %s19, 1
        %s217 = scalar_select %p216, %s19, 1
        %s218 = smul.addr %s217, 4
        %s219 = scalar_lea.vmem %s0, %s218
        %v221 = vld [vmem:[%s219] sm:$0xf]
        %v222 = vld [vmem:[%s1] sm:$0xff]
        %v223 = vld [vmem:[%s1 + $0x8] sm:$0xff]
        %v224 = vld [vmem:[%s1 + $0x10] sm:$0xff]
        %v225 = vld [vmem:[%s1 + $0x18] sm:$0xff]
        %v226 = vld [vmem:[%s1 + $0x20] sm:$0xff]
        %v227 = vld [vmem:[%s1 + $0x28] sm:$0xff]
        %v228 = vld [vmem:[%s1 + $0x30] sm:$0xff]
        %v229 = vld [vmem:[%s1 + $0x38] sm:$0xff]
        %v230 = vld [vmem:[%s1 + $0x40] sm:$0xff]
        %v231 = vld [vmem:[%s1 + $0x48] sm:$0xff]
        %v232 = vld [vmem:[%s1 + $0x50] sm:$0xff]
        %v233 = vld [vmem:[%s1 + $0x58] sm:$0xff]
        %v234 = vld [vmem:[%s1 + $0x60] sm:$0xff]
        %v235 = vld [vmem:[%s1 + $0x68] sm:$0xff]
        %v236 = vld [vmem:[%s1 + $0x70] sm:$0xff]
        %v237 = vld [vmem:[%s1 + $0x78] sm:$0xff]
        %v238 = vld [vmem:[%s1 + $0x80] sm:$0xff]
        %v239 = vld [vmem:[%s1 + $0x88] sm:$0xff]
        %v240 = vld [vmem:[%s1 + $0x90] sm:$0xff]
        %v241 = vld [vmem:[%s1 + $0x98] sm:$0xff]
        %v242 = vld [vmem:[%s1 + $0xa0] sm:$0xff]
        %v243 = vld [vmem:[%s1 + $0xa8] sm:$0xff]
        %v244 = vld [vmem:[%s1 + $0xb0] sm:$0xff]
        %v245 = vld [vmem:[%s1 + $0xb8] sm:$0xff]
        %v246 = vld [vmem:[%s1 + $0xc0] sm:$0xff]
        %v247 = vld [vmem:[%s1 + $0xc8] sm:$0xff]
        %v248 = vld [vmem:[%s1 + $0xd0] sm:$0xff]
        %v249 = vld [vmem:[%s1 + $0xd8] sm:$0xff]
        %v250 = vld [vmem:[%s1 + $0xe0] sm:$0xff]
        %v251 = vld [vmem:[%s1 + $0xe8] sm:$0xff]
        %v252 = vld [vmem:[%s1 + $0xf0] sm:$0xff]
        %v253 = vld [vmem:[%s1 + $0xf8] sm:$0xff]
        %v254 = vld [vmem:[%s2] sm:$0xf]
        %v256 = vlaneseq
        %v257 = vshrl.u32 %v256, 7
        %v258 = vsub.s32 0, %v257
        %v259 = vrot.slane %v254, %v258
        %v260 = vlaneseq
        %v261 = vshrl.u32 %v260, 7
        %v262 = vsub.s32 1, %v261
        %v263 = vrot.slane %v254, %v262
        %v264 = vlaneseq
        %v265 = vshrl.u32 %v264, 7
        %v266 = vsub.s32 2, %v265
        %v267 = vrot.slane %v254, %v266
        %v268 = vlaneseq
        %v269 = vshrl.u32 %v268, 7
        %v270 = vsub.s32 3, %v269
        %v271 = vrot.slane %v254, %v270
        %v308 = vunpack.c.l.b16 %v222
        %v309 = vunpack.c.h.b16 %v222
        %v310 = vunpack.c.l.b16 %v223
        %v311 = vunpack.c.h.b16 %v223
        %v312 = vunpack.c.l.b16 %v224
        %v313 = vunpack.c.h.b16 %v224
        %v314 = vunpack.c.l.b16 %v225
        %v315 = vunpack.c.h.b16 %v225
        %v316 = vunpack.c.l.b16 %v226
        %v317 = vunpack.c.h.b16 %v226
        %v318 = vunpack.c.l.b16 %v227
        %v319 = vunpack.c.h.b16 %v227
        %v320 = vunpack.c.l.b16 %v228
        %v321 = vunpack.c.h.b16 %v228
        %v322 = vunpack.c.l.b16 %v229
        %v323 = vunpack.c.h.b16 %v229
        %v324 = vunpack.c.l.b16 %v230
        %v325 = vunpack.c.h.b16 %v230
        %v326 = vunpack.c.l.b16 %v231
        %v327 = vunpack.c.h.b16 %v231
        %v328 = vunpack.c.l.b16 %v232
        %v329 = vunpack.c.h.b16 %v232
        %v330 = vunpack.c.l.b16 %v233
        %v331 = vunpack.c.h.b16 %v233
        %v332 = vunpack.c.l.b16 %v234
        %v333 = vunpack.c.h.b16 %v234
        %v334 = vunpack.c.l.b16 %v235
        %v335 = vunpack.c.h.b16 %v235
        %v336 = vunpack.c.l.b16 %v236
        %v337 = vunpack.c.h.b16 %v236
        %v338 = vunpack.c.l.b16 %v237
        %v339 = vunpack.c.h.b16 %v237
        %v340 = vunpack.c.l.b16 %v238
        %v341 = vunpack.c.h.b16 %v238
        %v342 = vunpack.c.l.b16 %v239
        %v343 = vunpack.c.h.b16 %v239
        %v344 = vunpack.c.l.b16 %v240
        %v345 = vunpack.c.h.b16 %v240
        %v346 = vunpack.c.l.b16 %v241
        %v347 = vunpack.c.h.b16 %v241
        %v348 = vunpack.c.l.b16 %v242
        %v349 = vunpack.c.h.b16 %v242
        %v350 = vunpack.c.l.b16 %v243
        %v351 = vunpack.c.h.b16 %v243
        %v352 = vunpack.c.l.b16 %v244
        %v353 = vunpack.c.h.b16 %v244
        %v354 = vunpack.c.l.b16 %v245
        %v355 = vunpack.c.h.b16 %v245
        %v356 = vunpack.c.l.b16 %v246
        %v357 = vunpack.c.h.b16 %v246
        %v358 = vunpack.c.l.b16 %v247
        %v359 = vunpack.c.h.b16 %v247
        %v360 = vunpack.c.l.b16 %v248
        %v361 = vunpack.c.h.b16 %v248
        %v362 = vunpack.c.l.b16 %v249
        %v363 = vunpack.c.h.b16 %v249
        %v364 = vunpack.c.l.b16 %v250
        %v365 = vunpack.c.h.b16 %v250
        %v366 = vunpack.c.l.b16 %v251
        %v367 = vunpack.c.h.b16 %v251
        %v368 = vunpack.c.l.b16 %v252
        %v369 = vunpack.c.h.b16 %v252
        %v370 = vunpack.c.l.b16 %v253
        %v371 = vunpack.c.h.b16 %v253
        %v372 = vpack.c.b16 %v312, %v308
        %v373 = vpack.c.b16 %v313, %v309
        %v374 = vpack.c.b16 %v314, %v310
        %v375 = vpack.c.b16 %v315, %v311
        %v376 = vpack.c.b16 %v320, %v316
        %v377 = vpack.c.b16 %v321, %v317
        %v378 = vpack.c.b16 %v322, %v318
        %v379 = vpack.c.b16 %v323, %v319
        %v380 = vpack.c.b16 %v328, %v324
        %v381 = vpack.c.b16 %v329, %v325
        %v382 = vpack.c.b16 %v330, %v326
        %v383 = vpack.c.b16 %v331, %v327
        %v384 = vpack.c.b16 %v336, %v332
        %v385 = vpack.c.b16 %v337, %v333
        %v386 = vpack.c.b16 %v338, %v334
        %v387 = vpack.c.b16 %v339, %v335
        %v388 = vpack.c.b16 %v344, %v340
        %v389 = vpack.c.b16 %v345, %v341
        %v390 = vpack.c.b16 %v346, %v342
        %v391 = vpack.c.b16 %v347, %v343
        %v392 = vpack.c.b16 %v352, %v348
        %v393 = vpack.c.b16 %v353, %v349
        %v394 = vpack.c.b16 %v354, %v350
        %v395 = vpack.c.b16 %v355, %v351
        %v396 = vpack.c.b16 %v360, %v356
        %v397 = vpack.c.b16 %v361, %v357
        %v398 = vpack.c.b16 %v362, %v358
        %v399 = vpack.c.b16 %v363, %v359
        %v400 = vpack.c.b16 %v368, %v364
        %v401 = vpack.c.b16 %v369, %v365
        %v402 = vpack.c.b16 %v370, %v366
        %v403 = vpack.c.b16 %v371, %v367
        %436 = vmatprep.subr.bf16.mxu0 %v373
        %437 = vmatpush1.bf16.msra.mxu0 %v372
        %438 = vmatprep.subr.bf16.mxu0 %v377
        %439 = vmatpush1.bf16.msra.mxu0 %v376
        %440 = vmatprep.subr.bf16.mxu0 %v381
        %441 = vmatpush1.bf16.msra.mxu0 %v380
        %442 = vmatprep.subr.bf16.mxu0 %v385
        %443 = vmatpush1.bf16.msra.mxu0 %v384
        %444 = vmatprep.subr.bf16.mxu0 %v389
        %445 = vmatpush1.bf16.msra.mxu0 %v388
        %446 = vmatprep.subr.bf16.mxu0 %v393
        %447 = vmatpush1.bf16.msra.mxu0 %v392
        %448 = vmatprep.subr.bf16.mxu0 %v397
        %449 = vmatpush1.bf16.msra.mxu0 %v396
        %450 = vmatprep.subr.bf16.mxu0 %v401
        %451 = vmatpush1.bf16.msra.mxu0 %v400
        %452 = vmatprep.subr.bf16.mxu0 0
        %453 = vmatpush1.bf16.msra.mxu0 0
        %454 = vmatprep.subr.bf16.mxu0 0
        %455 = vmatpush1.bf16.msra.mxu0 0
        %456 = vmatprep.subr.bf16.mxu0 0
        %457 = vmatpush1.bf16.msra.mxu0 0
        %458 = vmatprep.subr.bf16.mxu0 0
        %459 = vmatpush1.bf16.msra.mxu0 0
        %460 = vmatprep.subr.bf16.mxu0 0
        %461 = vmatpush1.bf16.msra.mxu0 0
        %462 = vmatprep.subr.bf16.mxu0 0
        %463 = vmatpush1.bf16.msra.mxu0 0
        %464 = vmatprep.subr.bf16.mxu0 0
        %465 = vmatpush1.bf16.msra.mxu0 0
        %466 = vmatprep.subr.bf16.mxu0 0
        %467 = vmatpush1.bf16.msra.mxu0 0
        %468 = vmatprep.mubr.bf16.mxu0 0
        %469 = vmatmul.mubr.bf16.gmra.mrb[0].mxu0 %v221
        %v470 = vpop.f32.mrb[0].mxu0
        %v471 = vadd.f32 %v259, %v470
        %v472 = vpop.f32.mrb[0].mxu0
        %v473 = vadd.f32 %v263, %v472
        %v474 = vpop.f32.mrb[0].mxu0
        %v475 = vpop.f32.mrb[0].mxu0
        %476 = vdwg.mxu0
        %477 = vmatprep.subr.bf16.mxu0 %v375
        %478 = vmatpush1.bf16.msra.mxu0 %v374
        %479 = vmatprep.subr.bf16.mxu0 %v379
        %480 = vmatpush1.bf16.msra.mxu0 %v378
        %481 = vmatprep.subr.bf16.mxu0 %v383
        %482 = vmatpush1.bf16.msra.mxu0 %v382
        %483 = vmatprep.subr.bf16.mxu0 %v387
        %484 = vmatpush1.bf16.msra.mxu0 %v386
        %485 = vmatprep.subr.bf16.mxu0 %v391
        %486 = vmatpush1.bf16.msra.mxu0 %v390
        %487 = vmatprep.subr.bf16.mxu0 %v395
        %488 = vmatpush1.bf16.msra.mxu0 %v394
        %489 = vmatprep.subr.bf16.mxu0 %v399
        %490 = vmatpush1.bf16.msra.mxu0 %v398
        %491 = vmatprep.subr.bf16.mxu0 %v403
        %492 = vmatpush1.bf16.msra.mxu0 %v402
        %493 = vmatprep.subr.bf16.mxu0 0
        %494 = vmatpush1.bf16.msra.mxu0 0
        %495 = vmatprep.subr.bf16.mxu0 0
        %496 = vmatpush1.bf16.msra.mxu0 0
        %497 = vmatprep.subr.bf16.mxu0 0
        %498 = vmatpush1.bf16.msra.mxu0 0
        %499 = vmatprep.subr.bf16.mxu0 0
        %500 = vmatpush1.bf16.msra.mxu0 0
        %501 = vmatprep.subr.bf16.mxu0 0
        %502 = vmatpush1.bf16.msra.mxu0 0
        %503 = vmatprep.subr.bf16.mxu0 0
        %504 = vmatpush1.bf16.msra.mxu0 0
        %505 = vmatprep.subr.bf16.mxu0 0
        %506 = vmatpush1.bf16.msra.mxu0 0
        %507 = vmatprep.subr.bf16.mxu0 0
        %508 = vmatpush1.bf16.msra.mxu0 0
        %509 = vmatprep.mubr.bf16.mxu0 0
        %510 = vmatmul.mubr.bf16.gmra.mrb[0].mxu0 %v221
        %v511 = vpop.f32.mrb[0].mxu0
        %v512 = vadd.f32 %v267, %v511
        %v513 = vpop.f32.mrb[0].mxu0
        %v514 = vadd.f32 %v271, %v513
        %v515 = vpop.f32.mrb[0].mxu0
        %v516 = vpop.f32.mrb[0].mxu0
        %517 = vdwg.mxu0
        %v518 = vmax.f32 %v471, 0.0
        %v519 = vmax.f32 %v473, 0.0
        %v520 = vmax.f32 %v512, 0.0
        %v521 = vmax.f32 %v514, 0.0
        %v522 = vpack.c.bf16 %v518, %v518
        %v523 = vpack.c.bf16 %v519, %v519
        %v524 = vpack.c.bf16 %v520, %v520
        %v525 = vpack.c.bf16 %v521, %v521
        %v526 = vld [vmem:[%s3] sm:$0xf]
        %v527 = vld [vmem:[%s3 + $0x4] sm:$0xf]
        %v528 = vld [vmem:[%s3 + $0x8] sm:$0xf]
        %v529 = vld [vmem:[%s3 + $0xc] sm:$0xf]
        %v530 = vld [vmem:[%s3 + $0x10] sm:$0xf]
        %v531 = vld [vmem:[%s3 + $0x14] sm:$0xf]
        %v532 = vld [vmem:[%s3 + $0x18] sm:$0xf]
        %v533 = vld [vmem:[%s3 + $0x1c] sm:$0xf]
        %v534 = vld [vmem:[%s3 + $0x20] sm:$0xf]
        %v535 = vld [vmem:[%s3 + $0x24] sm:$0xf]
        %v536 = vld [vmem:[%s3 + $0x28] sm:$0xf]
        %v537 = vld [vmem:[%s3 + $0x2c] sm:$0xf]
        %v538 = vld [vmem:[%s3 + $0x30] sm:$0xf]
        %v539 = vld [vmem:[%s3 + $0x34] sm:$0xf]
        %v540 = vld [vmem:[%s3 + $0x38] sm:$0xf]
        %v541 = vld [vmem:[%s3 + $0x3c] sm:$0xf]
        %v542 = vld [vmem:[%s3 + $0x40] sm:$0xf]
        %v543 = vld [vmem:[%s3 + $0x44] sm:$0xf]
        %v544 = vld [vmem:[%s3 + $0x48] sm:$0xf]
        %v545 = vld [vmem:[%s3 + $0x4c] sm:$0xf]
        %v546 = vld [vmem:[%s3 + $0x50] sm:$0xf]
        %v547 = vld [vmem:[%s3 + $0x54] sm:$0xf]
        %v548 = vld [vmem:[%s3 + $0x58] sm:$0xf]
        %v549 = vld [vmem:[%s3 + $0x5c] sm:$0xf]
        %v550 = vld [vmem:[%s3 + $0x60] sm:$0xf]
        %v551 = vld [vmem:[%s3 + $0x64] sm:$0xf]
        %v552 = vld [vmem:[%s3 + $0x68] sm:$0xf]
        %v553 = vld [vmem:[%s3 + $0x6c] sm:$0xf]
        %v554 = vld [vmem:[%s3 + $0x70] sm:$0xf]
        %v555 = vld [vmem:[%s3 + $0x74] sm:$0xf]
        %v556 = vld [vmem:[%s3 + $0x78] sm:$0xf]
        %v557 = vld [vmem:[%s3 + $0x7c] sm:$0xf]
        %v558 = vld [vmem:[%s3 + $0x80] sm:$0xf]
        %v559 = vld [vmem:[%s3 + $0x84] sm:$0xf]
        %v560 = vld [vmem:[%s3 + $0x88] sm:$0xf]
        %v561 = vld [vmem:[%s3 + $0x8c] sm:$0xf]
        %v562 = vld [vmem:[%s3 + $0x90] sm:$0xf]
        %v563 = vld [vmem:[%s3 + $0x94] sm:$0xf]
        %v564 = vld [vmem:[%s3 + $0x98] sm:$0xf]
        %v565 = vld [vmem:[%s3 + $0x9c] sm:$0xf]
        %v566 = vld [vmem:[%s3 + $0xa0] sm:$0xf]
        %v567 = vld [vmem:[%s3 + $0xa4] sm:$0xf]
        %v568 = vld [vmem:[%s3 + $0xa8] sm:$0xf]
        %v569 = vld [vmem:[%s3 + $0xac] sm:$0xf]
        %v570 = vld [vmem:[%s3 + $0xb0] sm:$0xf]
        %v571 = vld [vmem:[%s3 + $0xb4] sm:$0xf]
        %v572 = vld [vmem:[%s3 + $0xb8] sm:$0xf]
        %v573 = vld [vmem:[%s3 + $0xbc] sm:$0xf]
        %v574 = vld [vmem:[%s3 + $0xc0] sm:$0xf]
        %v575 = vld [vmem:[%s3 + $0xc4] sm:$0xf]
        %v576 = vld [vmem:[%s3 + $0xc8] sm:$0xf]
        %v577 = vld [vmem:[%s3 + $0xcc] sm:$0xf]
        %v578 = vld [vmem:[%s3 + $0xd0] sm:$0xf]
        %v579 = vld [vmem:[%s3 + $0xd4] sm:$0xf]
        %v580 = vld [vmem:[%s3 + $0xd8] sm:$0xf]
        %v581 = vld [vmem:[%s3 + $0xdc] sm:$0xf]
        %v582 = vld [vmem:[%s3 + $0xe0] sm:$0xf]
        %v583 = vld [vmem:[%s3 + $0xe4] sm:$0xf]
        %v584 = vld [vmem:[%s3 + $0xe8] sm:$0xf]
        %v585 = vld [vmem:[%s3 + $0xec] sm:$0xf]
        %v586 = vld [vmem:[%s3 + $0xf0] sm:$0xf]
        %v587 = vld [vmem:[%s3 + $0xf4] sm:$0xf]
        %v588 = vld [vmem:[%s3 + $0xf8] sm:$0xf]
        %v589 = vld [vmem:[%s3 + $0xfc] sm:$0xf]
        %v590 = vld [vmem:[%s4] sm:$0x1]
        %v592 = vlaneseq
        %v593 = vshrl.u32 %v592, 7
        %v594 = vsub.s32 0, %v593
        %v595 = vrot.slane %v590, %v594
        %v661 = vunpack.c.l.b16 %v526
        %v662 = vunpack.c.l.b16 %v527
        %v663 = vunpack.c.l.b16 %v528
        %v664 = vunpack.c.l.b16 %v529
        %v665 = vunpack.c.l.b16 %v530
        %v666 = vunpack.c.l.b16 %v531
        %v667 = vunpack.c.l.b16 %v532
        %v668 = vunpack.c.l.b16 %v533
        %v669 = vunpack.c.l.b16 %v534
        %v670 = vunpack.c.l.b16 %v535
        %v671 = vunpack.c.l.b16 %v536
        %v672 = vunpack.c.l.b16 %v537
        %v673 = vunpack.c.l.b16 %v538
        %v674 = vunpack.c.l.b16 %v539
        %v675 = vunpack.c.l.b16 %v540
        %v676 = vunpack.c.l.b16 %v541
        %v677 = vunpack.c.l.b16 %v542
        %v678 = vunpack.c.l.b16 %v543
        %v679 = vunpack.c.l.b16 %v544
        %v680 = vunpack.c.l.b16 %v545
        %v681 = vunpack.c.l.b16 %v546
        %v682 = vunpack.c.l.b16 %v547
        %v683 = vunpack.c.l.b16 %v548
        %v684 = vunpack.c.l.b16 %v549
        %v685 = vunpack.c.l.b16 %v550
        %v686 = vunpack.c.l.b16 %v551
        %v687 = vunpack.c.l.b16 %v552
        %v688 = vunpack.c.l.b16 %v553
        %v689 = vunpack.c.l.b16 %v554
        %v690 = vunpack.c.l.b16 %v555
        %v691 = vunpack.c.l.b16 %v556
        %v692 = vunpack.c.l.b16 %v557
        %v693 = vunpack.c.l.b16 %v558
        %v694 = vunpack.c.l.b16 %v559
        %v695 = vunpack.c.l.b16 %v560
        %v696 = vunpack.c.l.b16 %v561
        %v697 = vunpack.c.l.b16 %v562
        %v698 = vunpack.c.l.b16 %v563
        %v699 = vunpack.c.l.b16 %v564
        %v700 = vunpack.c.l.b16 %v565
        %v701 = vunpack.c.l.b16 %v566
        %v702 = vunpack.c.l.b16 %v567
        %v703 = vunpack.c.l.b16 %v568
        %v704 = vunpack.c.l.b16 %v569
        %v705 = vunpack.c.l.b16 %v570
        %v706 = vunpack.c.l.b16 %v571
        %v707 = vunpack.c.l.b16 %v572
        %v708 = vunpack.c.l.b16 %v573
        %v709 = vunpack.c.l.b16 %v574
        %v710 = vunpack.c.l.b16 %v575
        %v711 = vunpack.c.l.b16 %v576
        %v712 = vunpack.c.l.b16 %v577
        %v713 = vunpack.c.l.b16 %v578
        %v714 = vunpack.c.l.b16 %v579
        %v715 = vunpack.c.l.b16 %v580
        %v716 = vunpack.c.l.b16 %v581
        %v717 = vunpack.c.l.b16 %v582
        %v718 = vunpack.c.l.b16 %v583
        %v719 = vunpack.c.l.b16 %v584
        %v720 = vunpack.c.l.b16 %v585
        %v721 = vunpack.c.l.b16 %v586
        %v722 = vunpack.c.l.b16 %v587
        %v723 = vunpack.c.l.b16 %v588
        %v724 = vunpack.c.l.b16 %v589
        %v725 = vpack.c.b16 %v662, %v661
        %v726 = vpack.c.b16 %v664, %v663
        %v727 = vpack.c.b16 %v666, %v665
        %v728 = vpack.c.b16 %v668, %v667
        %v729 = vpack.c.b16 %v670, %v669
        %v730 = vpack.c.b16 %v672, %v671
        %v731 = vpack.c.b16 %v674, %v673
        %v732 = vpack.c.b16 %v676, %v675
        %v733 = vpack.c.b16 %v678, %v677
        %v734 = vpack.c.b16 %v680, %v679
        %v735 = vpack.c.b16 %v682, %v681
        %v736 = vpack.c.b16 %v684, %v683
        %v737 = vpack.c.b16 %v686, %v685
        %v738 = vpack.c.b16 %v688, %v687
        %v739 = vpack.c.b16 %v690, %v689
        %v740 = vpack.c.b16 %v692, %v691
        %v741 = vpack.c.b16 %v694, %v693
        %v742 = vpack.c.b16 %v696, %v695
        %v743 = vpack.c.b16 %v698, %v697
        %v744 = vpack.c.b16 %v700, %v699
        %v745 = vpack.c.b16 %v702, %v701
        %v746 = vpack.c.b16 %v704, %v703
        %v747 = vpack.c.b16 %v706, %v705
        %v748 = vpack.c.b16 %v708, %v707
        %v749 = vpack.c.b16 %v710, %v709
        %v750 = vpack.c.b16 %v712, %v711
        %v751 = vpack.c.b16 %v714, %v713
        %v752 = vpack.c.b16 %v716, %v715
        %v753 = vpack.c.b16 %v718, %v717
        %v754 = vpack.c.b16 %v720, %v719
        %v755 = vpack.c.b16 %v722, %v721
        %v756 = vpack.c.b16 %v724, %v723
        %789 = vmatprep.subr.bf16.mxu0 0
        %790 = vmatpush1.bf16.msra.mxu0 %v725
        %791 = vmatprep.subr.bf16.mxu0 0
        %792 = vmatpush1.bf16.msra.mxu0 %v726
        %793 = vmatprep.subr.bf16.mxu0 0
        %794 = vmatpush1.bf16.msra.mxu0 %v727
        %795 = vmatprep.subr.bf16.mxu0 0
        %796 = vmatpush1.bf16.msra.mxu0 %v728
        %797 = vmatprep.subr.bf16.mxu0 0
        %798 = vmatpush1.bf16.msra.mxu0 %v729
        %799 = vmatprep.subr.bf16.mxu0 0
        %800 = vmatpush1.bf16.msra.mxu0 %v730
        %801 = vmatprep.subr.bf16.mxu0 0
        %802 = vmatpush1.bf16.msra.mxu0 %v731
        %803 = vmatprep.subr.bf16.mxu0 0
        %804 = vmatpush1.bf16.msra.mxu0 %v732
        %805 = vmatprep.subr.bf16.mxu0 0
        %806 = vmatpush1.bf16.msra.mxu0 %v733
        %807 = vmatprep.subr.bf16.mxu0 0
        %808 = vmatpush1.bf16.msra.mxu0 %v734
        %809 = vmatprep.subr.bf16.mxu0 0
        %810 = vmatpush1.bf16.msra.mxu0 %v735
        %811 = vmatprep.subr.bf16.mxu0 0
        %812 = vmatpush1.bf16.msra.mxu0 %v736
        %813 = vmatprep.subr.bf16.mxu0 0
        %814 = vmatpush1.bf16.msra.mxu0 %v737
        %815 = vmatprep.subr.bf16.mxu0 0
        %816 = vmatpush1.bf16.msra.mxu0 %v738
        %817 = vmatprep.subr.bf16.mxu0 0
        %818 = vmatpush1.bf16.msra.mxu0 %v739
        %819 = vmatprep.subr.bf16.mxu0 0
        %820 = vmatpush1.bf16.msra.mxu0 %v740
        %821 = vmatprep.mubr.bf16.mxu0 %v523
        %822 = vmatmul.mubr.bf16.gmra.mrb[0].mxu0 %v522
        %v823 = vpop.f32.mrb[0].mxu0
        %v824 = vadd.f32 %v595, %v823
        %v825 = vpop.f32.mrb[0].mxu0
        %v826 = vpop.f32.mrb[0].mxu0
        %v827 = vpop.f32.mrb[0].mxu0
        %828 = vdwg.mxu0
        %829 = vmatprep.subr.bf16.mxu0 0
        %830 = vmatpush1.bf16.msra.mxu0 %v741
        %831 = vmatprep.subr.bf16.mxu0 0
        %832 = vmatpush1.bf16.msra.mxu0 %v742
        %833 = vmatprep.subr.bf16.mxu0 0
        %834 = vmatpush1.bf16.msra.mxu0 %v743
        %835 = vmatprep.subr.bf16.mxu0 0
        %836 = vmatpush1.bf16.msra.mxu0 %v744
        %837 = vmatprep.subr.bf16.mxu0 0
        %838 = vmatpush1.bf16.msra.mxu0 %v745
        %839 = vmatprep.subr.bf16.mxu0 0
        %840 = vmatpush1.bf16.msra.mxu0 %v746
        %841 = vmatprep.subr.bf16.mxu0 0
        %842 = vmatpush1.bf16.msra.mxu0 %v747
        %843 = vmatprep.subr.bf16.mxu0 0
        %844 = vmatpush1.bf16.msra.mxu0 %v748
        %845 = vmatprep.subr.bf16.mxu0 0
        %846 = vmatpush1.bf16.msra.mxu0 %v749
        %847 = vmatprep.subr.bf16.mxu0 0
        %848 = vmatpush1.bf16.msra.mxu0 %v750
        %849 = vmatprep.subr.bf16.mxu0 0
        %850 = vmatpush1.bf16.msra.mxu0 %v751
        %851 = vmatprep.subr.bf16.mxu0 0
        %852 = vmatpush1.bf16.msra.mxu0 %v752
        %853 = vmatprep.subr.bf16.mxu0 0
        %854 = vmatpush1.bf16.msra.mxu0 %v753
        %855 = vmatprep.subr.bf16.mxu0 0
        %856 = vmatpush1.bf16.msra.mxu0 %v754
        %857 = vmatprep.subr.bf16.mxu0 0
        %858 = vmatpush1.bf16.msra.mxu0 %v755
        %859 = vmatprep.subr.bf16.mxu0 0
        %860 = vmatpush1.bf16.msra.mxu0 %v756
        %861 = vmatprep.mubr.bf16.mxu0 %v525
        %862 = vmatmul.mubr.bf16.gmra.mrb[0].mxu0 %v524
        %v863 = vpop.f32.mrb[0].mxu0
        %v864 = vadd.f32 %v824, %v863
        %v865 = vpop.f32.mrb[0].mxu0
        %v866 = vpop.f32.mrb[0].mxu0
        %v867 = vpop.f32.mrb[0].mxu0
        %868 = vdwg.mxu0
        %869 = vst [vmem:[%s215] sm:$0xff] %v864
        %s870 = sand.u32 %s137, 1
        %s871 = scalar_lea.sflag [#allocation3], %s870
        %s872 = sand.u32 %s137, 1
        %s873 = smul.addr %s872, 8
        %s874 = scalar_lea.vmem [#allocation2], %s873
        // Predicated region
        $region41: #{feed_forward_block.1} parent=39 // pred_check
          %p875 = pneg %p147
        $region42: #{feed_forward_block.1} parent=39 // pred_check_branch
          %877 = sbr.rel (%p875) target = $region44
        $region43: #{feed_forward_block.1} parent=39 // pred_region
          %s879 = ssub.s32 128, 128
          %880 = vsyncadd %s871, %s879
          %s881 = smul.addr %s19, 128
          %s882 = scalar_lea.hbm %s5, %s881
          %s884 = sshll.u32 %s874, 4
          %s885 = int_to_ptr.vmem [resolvable:$true] %s884
          %887 = dma.vmem_to_hbm [thread:$0]  %s885, 128, %s882, %s871
        $region44: #{feed_forward_block.1} parent=39 // pred_fallthru
          _
      $region40: #{feed_forward_block.1} parent=5 // pred_fallthru
        _
      %p888 = scmp.le.s32.totalorder 2, %s14
      // Predicated region
      $region45: #{feed_forward_block.1} parent=5 // pred_check
        %p889 = pneg %p888
      $region46: #{feed_forward_block.1} parent=5 // pred_check_branch
        %891 = sbr.rel (%p889) target = $region48
      $region47: #{feed_forward_block.1} parent=5 // pred_region
        %s892 = ssub.s32 %s14, 2
        // Predicated region
        $region49: #{feed_forward_block.1} parent=47 // pred_check
          %p893 = pneg %p153
        $region50: #{feed_forward_block.1} parent=47 // pred_check_branch
          %895 = sbr.rel (%p893) target = $region52
        $region51: #{feed_forward_block.1} parent=47 // pred_region
          %s896 = sand.u32 %s138, 1
          %s897 = scalar_lea.sflag [#allocation3], %s896
          %s898 = sand.u32 %s138, 1
          %s899 = smul.addr %s898, 8
          %s900 = scalar_lea.vmem [#allocation2], %s899
          %901 = dma.done %s897, 128
        $region52: #{feed_forward_block.1} parent=47 // pred_fallthru
          _
      $region48: #{feed_forward_block.1} parent=5 // pred_fallthru
        _
    $region6: #{feed_forward_block.1} parent=1 // loop_footer
      %s18 = sadd.s32 1, %s14
    $region7: #{feed_forward_block.1} parent=1 // loop_footer_branch
      %13 = sbr.rel target = $region3
    $region8: #{feed_forward_block.1} parent=1 // loop_exit
      _
    %902 = vsyncpa [#allocation3], 1
    %s903 = scalar_lea.sflag [#allocation3], 1
    %904 = vsyncpa %s903, 1

</llo_original>
